<compile_context>
chip_gen: v7x
topology: tpu7x:2x2x1
jax: 0.10.0
libtpu: 0.0.40
codegen_flags: <defaults>
</compile_context>

<pallas_src>
import jax
import jax.numpy as jnp
from jax.experimental import pallas as pl
from jax.experimental.pallas import tpu as pltpu

BN_EPS = 1e-5
INPUT_SIZE = 50 * 4 * 4   # 800, the module's default input_size
HIDDEN = 100
HIDDEN_PAD = 128          # lane-dense padding of the hidden dimension
NUM_CLASSES = 1


def discriminator_kernel(x_ref, w1_ref, params_ref, o_ref):
    # ---- Linear(800 -> 100, padded to 128) ----
    # x arrives f32 and is cast to bf16 in-kernel (free VPU filler); the MXU
    # matmul accumulates in f32 via preferred_element_type.
    x = x_ref[...].astype(jnp.bfloat16)                       # (B, 800) bf16
    w1 = w1_ref[...]                                          # (800, 128) bf16, cols 100..127 = 0
    h = jnp.dot(x, w1, preferred_element_type=jnp.float32)    # (B, 128) f32
    # b1 intentionally omitted: training-mode BatchNorm's batch-mean
    # subtraction cancels a per-feature constant bias exactly.

    # ---- single packed parameter block: rows = [gamma, beta, w2, (b2, 0...)] ----
    p = params_ref[...]                                       # (4, 128) f32
    gamma = p[0:1, :]
    beta = p[1:2, :]
    w2 = p[2:3, :]
    b2 = p[3:4, 0:1]                                          # (1, 1)

    # ---- BatchNorm1d(100), training mode (batch mean / biased batch var) ----
    inv_b = jnp.float32(1.0 / h.shape[0])
    s1 = jnp.sum(h, axis=0, keepdims=True)                    # (1, 128)
    s2 = jnp.sum(h * h, axis=0, keepdims=True)                # (1, 128), same reduce pass
    mean = s1 * inv_b
    var = jnp.maximum(s2 * inv_b - mean * mean, 0.0)          # biased var, clamp fp error
    scale = gamma * jax.lax.rsqrt(var + BN_EPS)               # padded lanes: gamma=0 -> scale=0
    shift = beta - mean * scale                               # padded lanes: 0
    h = h * scale + shift

    # ---- ReLU ----
    h = jnp.maximum(h, 0.0)

    # ---- Linear(100 -> 1) as VPU multiply + XLU lane reduce (MXU N=1 is wasteful) ----
    y = jnp.sum(h * w2, axis=-1, keepdims=True) + b2          # (B, 1) f32

    # ---- LogSoftmax(dim=1) over a size-1 class dim (exact formula; result is 0) ----
    m = jnp.max(y, axis=1, keepdims=True)
    lse = m + jnp.log(jnp.sum(jnp.exp(y - m), axis=1, keepdims=True))
    o_ref[...] = (y - lse).astype(o_ref.dtype)


def discriminator_forward(x, w1_bf16, param_block):
    """x: (B, 800) f32; w1_bf16: (800, 128) bf16; param_block: (4, 128) f32."""
    B, in_features = x.shape
    hidden_pad = w1_bf16.shape[1]

    cost = pl.CostEstimate(
        flops=2 * B * in_features * hidden_pad + 10 * B * hidden_pad,
        transcendentals=hidden_pad + 2 * B,
        bytes_accessed=(x.size * 4 + w1_bf16.size * 2 + param_block.size * 4 + B * 4),
    )

    return pl.pallas_call(
        discriminator_kernel,
        out_shape=jax.ShapeDtypeStruct((B, 1), jnp.float32),
        in_specs=[pl.BlockSpec(memory_space=pltpu.MemorySpace.VMEM)] * 3,
        out_specs=pl.BlockSpec(memory_space=pltpu.MemorySpace.VMEM),
        cost_estimate=cost,
    )(x, w1_bf16, param_block)


def init_params(key, input_size=INPUT_SIZE, hidden=HIDDEN,
                hidden_pad=HIDDEN_PAD, num_classes=NUM_CLASSES):
    """PyTorch-like init, then pack into kernel-ready form ONCE (param-load time)."""
    k1, k2, k3, k4 = jax.random.split(key, 4)
    bound1 = 1.0 / jnp.sqrt(jnp.float32(input_size))
    bound2 = 1.0 / jnp.sqrt(jnp.float32(hidden))

    w1 = jax.random.uniform(k1, (input_size, hidden), jnp.float32, -bound1, bound1)
    b1 = jax.random.uniform(k2, (hidden,), jnp.float32, -bound1, bound1)   # cancelled by BN
    gamma = jnp.ones((hidden,), jnp.float32)    # BatchNorm1d default weight
    beta = jnp.zeros((hidden,), jnp.float32)    # BatchNorm1d default bias
    w2 = jax.random.uniform(k3, (num_classes, hidden), jnp.float32, -bound2, bound2)
    b2 = jax.random.uniform(k4, (num_classes,), jnp.float32, -bound2, bound2)

    # --- pack for the kernel: bf16 padded w1 + one (4, 128) f32 param block ---
    w1_bf16 = jnp.pad(w1, ((0, 0), (0, hidden_pad - hidden))).astype(jnp.bfloat16)

    def row(v):
        v = v.reshape(1, -1)
        return jnp.pad(v, ((0, 0), (0, hidden_pad - v.shape[1])))

    param_block = jnp.concatenate(
        [row(gamma), row(beta), row(w2[0]), row(b2)], axis=0)  # (4, 128) f32

    return w1_bf16, b1, param_block


if __name__ == "__main__":
    key = jax.random.PRNGKey(0)
    k_in, k_par = jax.random.split(key)

    B = 8  # small batch (>1 so training-mode BatchNorm statistics are defined)
    h_in = jax.random.normal(k_in, (B, INPUT_SIZE), jnp.float32)

    w1_bf16, b1, param_block = init_params(k_par)
    del b1  # mathematically cancelled by training-mode BatchNorm; never DMA'd

    out = discriminator_forward(h_in, w1_bf16, param_block)
    out = jax.block_until_ready(out)

    assert out.shape == (B, 1), out.shape
    assert out.dtype == jnp.float32, out.dtype
    # LogSoftmax over a single class is identically 0.
    assert bool(jnp.all(jnp.abs(out) < 1e-6))

    print("KERNEL_OK")
</pallas_src>

<mosaic_0001>
module attributes {stable_mosaic.version = 11 : i64} {
  func.func @discriminator_kernel(%arg0: memref<8x800xf32, #tpu.memory_space<vmem>>, %arg1: memref<800x128xbf16, #tpu.memory_space<vmem>>, %arg2: memref<4x128xf32, #tpu.memory_space<vmem>>, %arg3: memref<8x1xf32, #tpu.memory_space<vmem>>) attributes {dimension_semantics = [], scalar_prefetch = 0 : i64, scratch_operands = 0 : i64, tpu.core_type = #tpu.core_type<tc>} {
    %c0 = arith.constant 0 : index
    %c0_0 = arith.constant 0 : index
    %0 = vector.load %arg0[%c0, %c0_0] : memref<8x800xf32, #tpu.memory_space<vmem>>, vector<8x800xf32>
    %1 = arith.truncf %0 : vector<8x800xf32> to vector<8x800xbf16>
    %c0_1 = arith.constant 0 : index
    %c0_2 = arith.constant 0 : index
    %2 = vector.load %arg1[%c0_1, %c0_2] : memref<800x128xbf16, #tpu.memory_space<vmem>>, vector<800x128xbf16>
    %cst = arith.constant dense<0.000000e+00> : vector<8x128xf32>
    %3 = tpu.matmul %1, %2, %cst {dimension_numbers = #tpu.dot_dimension_numbers<[1], [0], [0], [1], [0, 0, 1, 1], [], []>} : vector<8x800xbf16>, vector<800x128xbf16>, vector<8x128xf32> -> vector<8x128xf32>
    %c0_3 = arith.constant 0 : index
    %c0_4 = arith.constant 0 : index
    %4 = vector.load %arg2[%c0_3, %c0_4] : memref<4x128xf32, #tpu.memory_space<vmem>>, vector<4x128xf32>
    %5 = vector.extract_strided_slice %4 {offsets = [0, 0], sizes = [1, 128], strides = [1, 1]} : vector<4x128xf32> to vector<1x128xf32>
    %6 = vector.extract_strided_slice %4 {offsets = [1, 0], sizes = [1, 128], strides = [1, 1]} : vector<4x128xf32> to vector<1x128xf32>
    %7 = vector.extract_strided_slice %4 {offsets = [2, 0], sizes = [1, 128], strides = [1, 1]} : vector<4x128xf32> to vector<1x128xf32>
    %8 = vector.extract_strided_slice %4 {offsets = [3, 0], sizes = [1, 1], strides = [1, 1]} : vector<4x128xf32> to vector<1x1xf32>
    %cst_5 = arith.constant dense<0.000000e+00> : vector<128xf32>
    %9 = vector.multi_reduction <add>, %3, %cst_5 [0] : vector<8x128xf32> to vector<128xf32>
    %10 = vector.shape_cast %9 : vector<128xf32> to vector<1x128xf32>
    %11 = arith.mulf %3, %3 : vector<8x128xf32>
    %cst_6 = arith.constant dense<0.000000e+00> : vector<128xf32>
    %12 = vector.multi_reduction <add>, %11, %cst_6 [0] : vector<8x128xf32> to vector<128xf32>
    %13 = vector.shape_cast %12 : vector<128xf32> to vector<1x128xf32>
    %cst_7 = arith.constant 1.250000e-01 : f32
    %14 = vector.broadcast %cst_7 : f32 to vector<1x128xf32>
    %15 = arith.mulf %10, %14 : vector<1x128xf32>
    %cst_8 = arith.constant 1.250000e-01 : f32
    %16 = vector.broadcast %cst_8 : f32 to vector<1x128xf32>
    %17 = arith.mulf %13, %16 : vector<1x128xf32>
    %18 = arith.mulf %15, %15 : vector<1x128xf32>
    %19 = arith.subf %17, %18 : vector<1x128xf32>
    %cst_9 = arith.constant 0.000000e+00 : f32
    %20 = vector.broadcast %cst_9 : f32 to vector<1x128xf32>
    %21 = arith.maximumf %19, %20 : vector<1x128xf32>
    %cst_10 = arith.constant 9.99999974E-6 : f32
    %22 = vector.broadcast %cst_10 : f32 to vector<1x128xf32>
    %23 = arith.addf %21, %22 : vector<1x128xf32>
    %24 = math.rsqrt %23 : vector<1x128xf32>
    %25 = arith.mulf %5, %24 : vector<1x128xf32>
    %26 = arith.mulf %15, %25 : vector<1x128xf32>
    %27 = arith.subf %6, %26 : vector<1x128xf32>
    %28 = vector.broadcast %25 : vector<1x128xf32> to vector<8x128xf32>
    %29 = arith.mulf %3, %28 : vector<8x128xf32>
    %30 = vector.broadcast %27 : vector<1x128xf32> to vector<8x128xf32>
    %31 = arith.addf %29, %30 : vector<8x128xf32>
    %cst_11 = arith.constant 0.000000e+00 : f32
    %32 = vector.broadcast %cst_11 : f32 to vector<8x128xf32>
    %33 = arith.maximumf %31, %32 : vector<8x128xf32>
    %34 = vector.broadcast %7 : vector<1x128xf32> to vector<8x128xf32>
    %35 = arith.mulf %33, %34 : vector<8x128xf32>
    %cst_12 = arith.constant dense<0.000000e+00> : vector<8xf32>
    %36 = vector.multi_reduction <add>, %35, %cst_12 [1] : vector<8x128xf32> to vector<8xf32>
    %37 = vector.shape_cast %36 : vector<8xf32> to vector<8x1xf32>
    %38 = vector.broadcast %8 : vector<1x1xf32> to vector<8x1xf32>
    %39 = arith.addf %37, %38 : vector<8x1xf32>
    %cst_13 = arith.constant dense<0xFF800000> : vector<8xf32>
    %40 = vector.multi_reduction <maximumf>, %39, %cst_13 [1] : vector<8x1xf32> to vector<8xf32>
    %41 = vector.shape_cast %40 : vector<8xf32> to vector<8x1xf32>
    %42 = arith.subf %39, %41 : vector<8x1xf32>
    %43 = math.exp %42 : vector<8x1xf32>
    %cst_14 = arith.constant dense<0.000000e+00> : vector<8xf32>
    %44 = vector.multi_reduction <add>, %43, %cst_14 [1] : vector<8x1xf32> to vector<8xf32>
    %45 = vector.shape_cast %44 : vector<8xf32> to vector<8x1xf32>
    %46 = math.log %45 : vector<8x1xf32>
    %47 = arith.addf %41, %46 : vector<8x1xf32>
    %48 = arith.subf %39, %47 : vector<8x1xf32>
    %c0_15 = arith.constant 0 : index
    %c0_16 = arith.constant 0 : index
    %49 = vector.load %arg3[%c0_15, %c0_16] : memref<8x1xf32, #tpu.memory_space<vmem>>, vector<8x1xf32>
    tpu.vector_store %arg3[%c0_15, %c0_16], %48 {strides = array<i32>} : memref<8x1xf32, #tpu.memory_space<vmem>>, vector<8x1xf32>,
    return
  }
}

</mosaic_0001>

<llo_original>
// kernel: tpu_custom_call.1
$region0: #{tpu_custom_call.1}
  #allocation0 [shape = 'u32[]', space=smem, size = 0x4, offset = 0x4, fixed_abs, tag = 'smem constant byte address 0x4 - core index']
  #allocation1 [shape = 'u32[144,128]{1,0:T(1,128)}', space=vmem, size = 0x12000, scoped, tag = 'internal scratch']
  %s0 = inlined_call_operand.hbm [shape: f32[8,800], index: 0, kind: input, shape index: {}]
  %s1 = inlined_call_operand.hbm [shape: bf16[800,128], index: 1, kind: input, shape index: {}]
  %s2 = inlined_call_operand.vmem [shape: f32[4,128], index: 2, kind: input, shape index: {}]
  %s3 = inlined_call_operand.vmem [shape: f32[8,1], index: 3, kind: output, shape index: {}]
  %s4 = sld [smem:[#allocation0]]
  $region30: #{tpu_custom_call.1} parent=0
    _
  %s6 = ssub.s32 1, %s4
  %s7 = scalar_select 0, %s6, %s4
  $region1: #{tpu_custom_call.1} parent=0
    #allocation2 [shape = 'u8[28672]{0}', space=vmem, size = 0x7000, scoped, tag = 'input window, operand 0, single buffered']
    #allocation3 [shape = 's32[1]{0}', space=sflag, size = 0x4, scoped, tag = 'scoped memory for tpu_custom_call.1']
    #allocation4 [shape = 'u8[204800]{0}', space=vmem, size = 0x32000, scoped, tag = 'input window, operand 1, single buffered']
    #allocation5 [shape = 's32[1]{0}', space=sflag, size = 0x4, scoped, tag = 'scoped memory for tpu_custom_call.1']
    %8 = vsyncpa [#allocation3], 0
    %9 = vsyncpa [#allocation5], 0
    // Predicated region
    $region2: #{tpu_custom_call.1} parent=1 // pred_check
      _
    $region3: #{tpu_custom_call.1} parent=1 // pred_check_branch
      %11 = sbr.rel (0) target = $region5
    $region4: #{tpu_custom_call.1} parent=1 // pred_region
      %s13 = ssub.s32 896, 896
      %14 = vsyncadd [#allocation3], %s13
      %s16 = sshll.u32 [#allocation2], 4
      %s17 = int_to_ptr.vmem [resolvable:$true] %s16
      %19 = dma.hbm_to_vmem [thread:$0]  %s0, 896, %s17, [#allocation3]
    $region5: #{tpu_custom_call.1} parent=1 // pred_fallthru
      _
    // Predicated region
    $region6: #{tpu_custom_call.1} parent=1 // pred_check
      _
    $region7: #{tpu_custom_call.1} parent=1 // pred_check_branch
      %21 = sbr.rel (0) target = $region9
    $region8: #{tpu_custom_call.1} parent=1 // pred_region
      %s23 = ssub.s32 6400, 6400
      %24 = vsyncadd [#allocation5], %s23
      %s25 = sshll.u32 [#allocation4], 4
      %s26 = int_to_ptr.vmem [resolvable:$true] %s25
      %31 = dma.hbm_to_vmem [thread:$0]  %s1, 6400, %s26, [#allocation5], 64, 64, 4
    $region9: #{tpu_custom_call.1} parent=1 // pred_fallthru
      _
    // Predicated region
    $region10: #{tpu_custom_call.1} parent=1 // pred_check
      _
    $region11: #{tpu_custom_call.1} parent=1 // pred_check_branch
      %33 = sbr.rel (0) target = $region13
    $region12: #{tpu_custom_call.1} parent=1 // pred_region
      _
    $region13: #{tpu_custom_call.1} parent=1 // pred_fallthru
      _
    // Predicated region
    $region14: #{tpu_custom_call.1} parent=1 // pred_check
      _
    $region15: #{tpu_custom_call.1} parent=1 // pred_check_branch
      %35 = sbr.rel (0) target = $region17
    $region16: #{tpu_custom_call.1} parent=1 // pred_region
      %36 = dma.done [#allocation3], 896
    $region17: #{tpu_custom_call.1} parent=1 // pred_fallthru
      _
    // Predicated region
    $region18: #{tpu_custom_call.1} parent=1 // pred_check
      _
    $region19: #{tpu_custom_call.1} parent=1 // pred_check_branch
      %38 = sbr.rel (0) target = $region21
    $region20: #{tpu_custom_call.1} parent=1 // pred_region
      %39 = dma.done [#allocation5], 6400
    $region21: #{tpu_custom_call.1} parent=1 // pred_fallthru
      _
    %v41 = vld [vmem:[#allocation2] sm:$0xff]
    %v42 = vld [vmem:[#allocation2 + $0x8] sm:$0xff]
    %v43 = vld [vmem:[#allocation2 + $0x10] sm:$0xff]
    %v44 = vld [vmem:[#allocation2 + $0x18] sm:$0xff]
    %v45 = vld [vmem:[#allocation2 + $0x20] sm:$0xff]
    %v46 = vld [vmem:[#allocation2 + $0x28] sm:$0xff]
    %v47 = vld [vmem:[#allocation2 + $0x30] sm:$0xff]
    %v48 = vpack.c.bf16 %v41, %v41
    %v49 = vpack.c.bf16 %v42, %v42
    %v50 = vpack.c.bf16 %v43, %v43
    %v51 = vpack.c.bf16 %v44, %v44
    %v52 = vpack.c.bf16 %v45, %v45
    %v53 = vpack.c.bf16 %v46, %v46
    %v54 = vpack.c.bf16 %v47, %v47
    %v55 = vld [vmem:[#allocation4] sm:$0xf]
    %v56 = vld [vmem:[#allocation4 + $0x4] sm:$0xf]
    %v57 = vld [vmem:[#allocation4 + $0x8] sm:$0xf]
    %v58 = vld [vmem:[#allocation4 + $0xc] sm:$0xf]
    %v59 = vld [vmem:[#allocation4 + $0x10] sm:$0xf]
    %v60 = vld [vmem:[#allocation4 + $0x14] sm:$0xf]
    %v61 = vld [vmem:[#allocation4 + $0x18] sm:$0xf]
    %v62 = vld [vmem:[#allocation4 + $0x1c] sm:$0xf]
    %v63 = vld [vmem:[#allocation4 + $0x20] sm:$0xf]
    %v64 = vld [vmem:[#allocation4 + $0x24] sm:$0xf]
    %v65 = vld [vmem:[#allocation4 + $0x28] sm:$0xf]
    %v66 = vld [vmem:[#allocation4 + $0x2c] sm:$0xf]
    %v67 = vld [vmem:[#allocation4 + $0x30] sm:$0xf]
    %v68 = vld [vmem:[#allocation4 + $0x34] sm:$0xf]
    %v69 = vld [vmem:[#allocation4 + $0x38] sm:$0xf]
    %v70 = vld [vmem:[#allocation4 + $0x3c] sm:$0xf]
    %v71 = vld [vmem:[#allocation4 + $0x40] sm:$0xf]
    %v72 = vld [vmem:[#allocation4 + $0x44] sm:$0xf]
    %v73 = vld [vmem:[#allocation4 + $0x48] sm:$0xf]
    %v74 = vld [vmem:[#allocation4 + $0x4c] sm:$0xf]
    %v75 = vld [vmem:[#allocation4 + $0x50] sm:$0xf]
    %v76 = vld [vmem:[#allocation4 + $0x54] sm:$0xf]
    %v77 = vld [vmem:[#allocation4 + $0x58] sm:$0xf]
    %v78 = vld [vmem:[#allocation4 + $0x5c] sm:$0xf]
    %v79 = vld [vmem:[#allocation4 + $0x60] sm:$0xf]
    %v80 = vld [vmem:[#allocation4 + $0x64] sm:$0xf]
    %v81 = vld [vmem:[#allocation4 + $0x68] sm:$0xf]
    %v82 = vld [vmem:[#allocation4 + $0x6c] sm:$0xf]
    %v83 = vld [vmem:[#allocation4 + $0x70] sm:$0xf]
    %v84 = vld [vmem:[#allocation4 + $0x74] sm:$0xf]
    %v85 = vld [vmem:[#allocation4 + $0x78] sm:$0xf]
    %v86 = vld [vmem:[#allocation4 + $0x7c] sm:$0xf]
    %v87 = vld [vmem:[#allocation4 + $0x80] sm:$0xf]
    %v88 = vld [vmem:[#allocation4 + $0x84] sm:$0xf]
    %v89 = vld [vmem:[#allocation4 + $0x88] sm:$0xf]
    %v90 = vld [vmem:[#allocation4 + $0x8c] sm:$0xf]
    %v91 = vld [vmem:[#allocation4 + $0x90] sm:$0xf]
    %v92 = vld [vmem:[#allocation4 + $0x94] sm:$0xf]
    %v93 = vld [vmem:[#allocation4 + $0x98] sm:$0xf]
    %v94 = vld [vmem:[#allocation4 + $0x9c] sm:$0xf]
    %v95 = vld [vmem:[#allocation4 + $0xa0] sm:$0xf]
    %v96 = vld [vmem:[#allocation4 + $0xa4] sm:$0xf]
    %v97 = vld [vmem:[#allocation4 + $0xa8] sm:$0xf]
    %v98 = vld [vmem:[#allocation4 + $0xac] sm:$0xf]
    %v99 = vld [vmem:[#allocation4 + $0xb0] sm:$0xf]
    %v100 = vld [vmem:[#allocation4 + $0xb4] sm:$0xf]
    %v101 = vld [vmem:[#allocation4 + $0xb8] sm:$0xf]
    %v102 = vld [vmem:[#allocation4 + $0xbc] sm:$0xf]
    %v103 = vld [vmem:[#allocation4 + $0xc0] sm:$0xf]
    %v104 = vld [vmem:[#allocation4 + $0xc4] sm:$0xf]
    %v105 = vld [vmem:[#allocation4 + $0xc8] sm:$0xf]
    %v106 = vld [vmem:[#allocation4 + $0xcc] sm:$0xf]
    %v107 = vld [vmem:[#allocation4 + $0xd0] sm:$0xf]
    %v108 = vld [vmem:[#allocation4 + $0xd4] sm:$0xf]
    %v109 = vld [vmem:[#allocation4 + $0xd8] sm:$0xf]
    %v110 = vld [vmem:[#allocation4 + $0xdc] sm:$0xf]
    %v111 = vld [vmem:[#allocation4 + $0xe0] sm:$0xf]
    %v112 = vld [vmem:[#allocation4 + $0xe4] sm:$0xf]
    %v113 = vld [vmem:[#allocation4 + $0xe8] sm:$0xf]
    %v114 = vld [vmem:[#allocation4 + $0xec] sm:$0xf]
    %v115 = vld [vmem:[#allocation4 + $0xf0] sm:$0xf]
    %v116 = vld [vmem:[#allocation4 + $0xf4] sm:$0xf]
    %v117 = vld [vmem:[#allocation4 + $0xf8] sm:$0xf]
    %v118 = vld [vmem:[#allocation4 + $0xfc] sm:$0xf]
    %v119 = vld [vmem:[#allocation4 + $0x100] sm:$0xf]
    %v120 = vld [vmem:[#allocation4 + $0x104] sm:$0xf]
    %v121 = vld [vmem:[#allocation4 + $0x108] sm:$0xf]
    %v122 = vld [vmem:[#allocation4 + $0x10c] sm:$0xf]
    %v123 = vld [vmem:[#allocation4 + $0x110] sm:$0xf]
    %v124 = vld [vmem:[#allocation4 + $0x114] sm:$0xf]
    %v125 = vld [vmem:[#allocation4 + $0x118] sm:$0xf]
    %v126 = vld [vmem:[#allocation4 + $0x11c] sm:$0xf]
    %v127 = vld [vmem:[#allocation4 + $0x120] sm:$0xf]
    %v128 = vld [vmem:[#allocation4 + $0x124] sm:$0xf]
    %v129 = vld [vmem:[#allocation4 + $0x128] sm:$0xf]
    %v130 = vld [vmem:[#allocation4 + $0x12c] sm:$0xf]
    %v131 = vld [vmem:[#allocation4 + $0x130] sm:$0xf]
    %v132 = vld [vmem:[#allocation4 + $0x134] sm:$0xf]
    %v133 = vld [vmem:[#allocation4 + $0x138] sm:$0xf]
    %v134 = vld [vmem:[#allocation4 + $0x13c] sm:$0xf]
    %v135 = vld [vmem:[#allocation4 + $0x140] sm:$0xf]
    %v136 = vld [vmem:[#allocation4 + $0x144] sm:$0xf]
    %v137 = vld [vmem:[#allocation4 + $0x148] sm:$0xf]
    %v138 = vld [vmem:[#allocation4 + $0x14c] sm:$0xf]
    %v139 = vld [vmem:[#allocation4 + $0x150] sm:$0xf]
    %v140 = vld [vmem:[#allocation4 + $0x154] sm:$0xf]
    %v141 = vld [vmem:[#allocation4 + $0x158] sm:$0xf]
    %v142 = vld [vmem:[#allocation4 + $0x15c] sm:$0xf]
    %v143 = vld [vmem:[#allocation4 + $0x160] sm:$0xf]
    %v144 = vld [vmem:[#allocation4 + $0x164] sm:$0xf]
    %v145 = vld [vmem:[#allocation4 + $0x168] sm:$0xf]
    %v146 = vld [vmem:[#allocation4 + $0x16c] sm:$0xf]
    %v147 = vld [vmem:[#allocation4 + $0x170] sm:$0xf]
    %v148 = vld [vmem:[#allocation4 + $0x174] sm:$0xf]
    %v149 = vld [vmem:[#allocation4 + $0x178] sm:$0xf]
    %v150 = vld [vmem:[#allocation4 + $0x17c] sm:$0xf]
    %v151 = vld [vmem:[#allocation4 + $0x180] sm:$0xf]
    %v152 = vld [vmem:[#allocation4 + $0x184] sm:$0xf]
    %v153 = vld [vmem:[#allocation4 + $0x188] sm:$0xf]
    %v154 = vld [vmem:[#allocation4 + $0x18c] sm:$0xf]
    %v255 = vunpack.c.l.b16 %v55
    %v256 = vunpack.c.l.b16 %v56
    %v257 = vunpack.c.l.b16 %v57
    %v258 = vunpack.c.l.b16 %v58
    %v259 = vunpack.c.l.b16 %v59
    %v260 = vunpack.c.l.b16 %v60
    %v261 = vunpack.c.l.b16 %v61
    %v262 = vunpack.c.l.b16 %v62
    %v263 = vunpack.c.l.b16 %v63
    %v264 = vunpack.c.l.b16 %v64
    %v265 = vunpack.c.l.b16 %v65
    %v266 = vunpack.c.l.b16 %v66
    %v267 = vunpack.c.l.b16 %v67
    %v268 = vunpack.c.l.b16 %v68
    %v269 = vunpack.c.l.b16 %v69
    %v270 = vunpack.c.l.b16 %v70
    %v271 = vunpack.c.l.b16 %v71
    %v272 = vunpack.c.l.b16 %v72
    %v273 = vunpack.c.l.b16 %v73
    %v274 = vunpack.c.l.b16 %v74
    %v275 = vunpack.c.l.b16 %v75
    %v276 = vunpack.c.l.b16 %v76
    %v277 = vunpack.c.l.b16 %v77
    %v278 = vunpack.c.l.b16 %v78
    %v279 = vunpack.c.l.b16 %v79
    %v280 = vunpack.c.l.b16 %v80
    %v281 = vunpack.c.l.b16 %v81
    %v282 = vunpack.c.l.b16 %v82
    %v283 = vunpack.c.l.b16 %v83
    %v284 = vunpack.c.l.b16 %v84
    %v285 = vunpack.c.l.b16 %v85
    %v286 = vunpack.c.l.b16 %v86
    %v287 = vunpack.c.l.b16 %v87
    %v288 = vunpack.c.l.b16 %v88
    %v289 = vunpack.c.l.b16 %v89
    %v290 = vunpack.c.l.b16 %v90
    %v291 = vunpack.c.l.b16 %v91
    %v292 = vunpack.c.l.b16 %v92
    %v293 = vunpack.c.l.b16 %v93
    %v294 = vunpack.c.l.b16 %v94
    %v295 = vunpack.c.l.b16 %v95
    %v296 = vunpack.c.l.b16 %v96
    %v297 = vunpack.c.l.b16 %v97
    %v298 = vunpack.c.l.b16 %v98
    %v299 = vunpack.c.l.b16 %v99
    %v300 = vunpack.c.l.b16 %v100
    %v301 = vunpack.c.l.b16 %v101
    %v302 = vunpack.c.l.b16 %v102
    %v303 = vunpack.c.l.b16 %v103
    %v304 = vunpack.c.l.b16 %v104
    %v305 = vunpack.c.l.b16 %v105
    %v306 = vunpack.c.l.b16 %v106
    %v307 = vunpack.c.l.b16 %v107
    %v308 = vunpack.c.l.b16 %v108
    %v309 = vunpack.c.l.b16 %v109
    %v310 = vunpack.c.l.b16 %v110
    %v311 = vunpack.c.l.b16 %v111
    %v312 = vunpack.c.l.b16 %v112
    %v313 = vunpack.c.l.b16 %v113
    %v314 = vunpack.c.l.b16 %v114
    %v315 = vunpack.c.l.b16 %v115
    %v316 = vunpack.c.l.b16 %v116
    %v317 = vunpack.c.l.b16 %v117
    %v318 = vunpack.c.l.b16 %v118
    %v319 = vunpack.c.l.b16 %v119
    %v320 = vunpack.c.l.b16 %v120
    %v321 = vunpack.c.l.b16 %v121
    %v322 = vunpack.c.l.b16 %v122
    %v323 = vunpack.c.l.b16 %v123
    %v324 = vunpack.c.l.b16 %v124
    %v325 = vunpack.c.l.b16 %v125
    %v326 = vunpack.c.l.b16 %v126
    %v327 = vunpack.c.l.b16 %v127
    %v328 = vunpack.c.l.b16 %v128
    %v329 = vunpack.c.l.b16 %v129
    %v330 = vunpack.c.l.b16 %v130
    %v331 = vunpack.c.l.b16 %v131
    %v332 = vunpack.c.l.b16 %v132
    %v333 = vunpack.c.l.b16 %v133
    %v334 = vunpack.c.l.b16 %v134
    %v335 = vunpack.c.l.b16 %v135
    %v336 = vunpack.c.l.b16 %v136
    %v337 = vunpack.c.l.b16 %v137
    %v338 = vunpack.c.l.b16 %v138
    %v339 = vunpack.c.l.b16 %v139
    %v340 = vunpack.c.l.b16 %v140
    %v341 = vunpack.c.l.b16 %v141
    %v342 = vunpack.c.l.b16 %v142
    %v343 = vunpack.c.l.b16 %v143
    %v344 = vunpack.c.l.b16 %v144
    %v345 = vunpack.c.l.b16 %v145
    %v346 = vunpack.c.l.b16 %v146
    %v347 = vunpack.c.l.b16 %v147
    %v348 = vunpack.c.l.b16 %v148
    %v349 = vunpack.c.l.b16 %v149
    %v350 = vunpack.c.l.b16 %v150
    %v351 = vunpack.c.l.b16 %v151
    %v352 = vunpack.c.l.b16 %v152
    %v353 = vunpack.c.l.b16 %v153
    %v354 = vunpack.c.l.b16 %v154
    %v355 = vpack.c.b16 %v256, %v255
    %v356 = vpack.c.b16 %v258, %v257
    %v357 = vpack.c.b16 %v260, %v259
    %v358 = vpack.c.b16 %v262, %v261
    %v359 = vpack.c.b16 %v264, %v263
    %v360 = vpack.c.b16 %v266, %v265
    %v361 = vpack.c.b16 %v268, %v267
    %v362 = vpack.c.b16 %v270, %v269
    %v363 = vpack.c.b16 %v272, %v271
    %v364 = vpack.c.b16 %v274, %v273
    %v365 = vpack.c.b16 %v276, %v275
    %v366 = vpack.c.b16 %v278, %v277
    %v367 = vpack.c.b16 %v280, %v279
    %v368 = vpack.c.b16 %v282, %v281
    %v369 = vpack.c.b16 %v284, %v283
    %v370 = vpack.c.b16 %v286, %v285
    %v371 = vpack.c.b16 %v288, %v287
    %v372 = vpack.c.b16 %v290, %v289
    %v373 = vpack.c.b16 %v292, %v291
    %v374 = vpack.c.b16 %v294, %v293
    %v375 = vpack.c.b16 %v296, %v295
    %v376 = vpack.c.b16 %v298, %v297
    %v377 = vpack.c.b16 %v300, %v299
    %v378 = vpack.c.b16 %v302, %v301
    %v379 = vpack.c.b16 %v304, %v303
    %v380 = vpack.c.b16 %v306, %v305
    %v381 = vpack.c.b16 %v308, %v307
    %v382 = vpack.c.b16 %v310, %v309
    %v383 = vpack.c.b16 %v312, %v311
    %v384 = vpack.c.b16 %v314, %v313
    %v385 = vpack.c.b16 %v316, %v315
    %v386 = vpack.c.b16 %v318, %v317
    %v387 = vpack.c.b16 %v320, %v319
    %v388 = vpack.c.b16 %v322, %v321
    %v389 = vpack.c.b16 %v324, %v323
    %v390 = vpack.c.b16 %v326, %v325
    %v391 = vpack.c.b16 %v328, %v327
    %v392 = vpack.c.b16 %v330, %v329
    %v393 = vpack.c.b16 %v332, %v331
    %v394 = vpack.c.b16 %v334, %v333
    %v395 = vpack.c.b16 %v336, %v335
    %v396 = vpack.c.b16 %v338, %v337
    %v397 = vpack.c.b16 %v340, %v339
    %v398 = vpack.c.b16 %v342, %v341
    %v399 = vpack.c.b16 %v344, %v343
    %v400 = vpack.c.b16 %v346, %v345
    %v401 = vpack.c.b16 %v348, %v347
    %v402 = vpack.c.b16 %v350, %v349
    %v403 = vpack.c.b16 %v352, %v351
    %v404 = vpack.c.b16 %v354, %v353
    %vm455 = vcmask 261120
    %v457 = vsel %vm455, %v54, 0
    %459 = vmatprep.subr.bf16.mxu0 0
    %460 = vmatpush1.bf16.msra.mxu0 %v355
    %461 = vmatprep.subr.bf16.mxu0 0
    %462 = vmatpush1.bf16.msra.mxu0 %v356
    %463 = vmatprep.subr.bf16.mxu0 0
    %464 = vmatpush1.bf16.msra.mxu0 %v357
    %465 = vmatprep.subr.bf16.mxu0 0
    %466 = vmatpush1.bf16.msra.mxu0 %v358
    %467 = vmatprep.subr.bf16.mxu0 0
    %468 = vmatpush1.bf16.msra.mxu0 %v359
    %469 = vmatprep.subr.bf16.mxu0 0
    %470 = vmatpush1.bf16.msra.mxu0 %v360
    %471 = vmatprep.subr.bf16.mxu0 0
    %472 = vmatpush1.bf16.msra.mxu0 %v361
    %473 = vmatprep.subr.bf16.mxu0 0
    %474 = vmatpush1.bf16.msra.mxu0 %v362
    %475 = vmatprep.subr.bf16.mxu0 0
    %476 = vmatpush1.bf16.msra.mxu0 %v363
    %477 = vmatprep.subr.bf16.mxu0 0
    %478 = vmatpush1.bf16.msra.mxu0 %v364
    %479 = vmatprep.subr.bf16.mxu0 0
    %480 = vmatpush1.bf16.msra.mxu0 %v365
    %481 = vmatprep.subr.bf16.mxu0 0
    %482 = vmatpush1.bf16.msra.mxu0 %v366
    %483 = vmatprep.subr.bf16.mxu0 0
    %484 = vmatpush1.bf16.msra.mxu0 %v367
    %485 = vmatprep.subr.bf16.mxu0 0
    %486 = vmatpush1.bf16.msra.mxu0 %v368
    %487 = vmatprep.subr.bf16.mxu0 0
    %488 = vmatpush1.bf16.msra.mxu0 %v369
    %489 = vmatprep.subr.bf16.mxu0 0
    %490 = vmatpush1.bf16.msra.mxu0 %v370
    %491 = vmatprep.mubr.bf16.mxu0 %v49
    %492 = vmatmul.mubr.bf16.gmra.mrb[0].mxu0 %v48
    %v493 = vpop.f32.mrb[0].mxu0
    %v494 = vadd.f32 0.0, %v493
    %v495 = vpop.f32.mrb[0].mxu0
    %v496 = vpop.f32.mrb[0].mxu0
    %v497 = vpop.f32.mrb[0].mxu0
    %498 = vdwg.mxu0
    %499 = vmatprep.subr.bf16.mxu0 0
    %500 = vmatpush1.bf16.msra.mxu0 %v371
    %501 = vmatprep.subr.bf16.mxu0 0
    %502 = vmatpush1.bf16.msra.mxu0 %v372
    %503 = vmatprep.subr.bf16.mxu0 0
    %504 = vmatpush1.bf16.msra.mxu0 %v373
    %505 = vmatprep.subr.bf16.mxu0 0
    %506 = vmatpush1.bf16.msra.mxu0 %v374
    %507 = vmatprep.subr.bf16.mxu0 0
    %508 = vmatpush1.bf16.msra.mxu0 %v375
    %509 = vmatprep.subr.bf16.mxu0 0
    %510 = vmatpush1.bf16.msra.mxu0 %v376
    %511 = vmatprep.subr.bf16.mxu0 0
    %512 = vmatpush1.bf16.msra.mxu0 %v377
    %513 = vmatprep.subr.bf16.mxu0 0
    %514 = vmatpush1.bf16.msra.mxu0 %v378
    %515 = vmatprep.subr.bf16.mxu0 0
    %516 = vmatpush1.bf16.msra.mxu0 %v379
    %517 = vmatprep.subr.bf16.mxu0 0
    %518 = vmatpush1.bf16.msra.mxu0 %v380
    %519 = vmatprep.subr.bf16.mxu0 0
    %520 = vmatpush1.bf16.msra.mxu0 %v381
    %521 = vmatprep.subr.bf16.mxu0 0
    %522 = vmatpush1.bf16.msra.mxu0 %v382
    %523 = vmatprep.subr.bf16.mxu0 0
    %524 = vmatpush1.bf16.msra.mxu0 %v383
    %525 = vmatprep.subr.bf16.mxu0 0
    %526 = vmatpush1.bf16.msra.mxu0 %v384
    %527 = vmatprep.subr.bf16.mxu0 0
    %528 = vmatpush1.bf16.msra.mxu0 %v385
    %529 = vmatprep.subr.bf16.mxu0 0
    %530 = vmatpush1.bf16.msra.mxu0 %v386
    %531 = vmatprep.mubr.bf16.mxu0 %v51
    %532 = vmatmul.mubr.bf16.gmra.mrb[0].mxu0 %v50
    %v533 = vpop.f32.mrb[0].mxu0
    %v534 = vadd.f32 %v494, %v533
    %v535 = vpop.f32.mrb[0].mxu0
    %v536 = vpop.f32.mrb[0].mxu0
    %v537 = vpop.f32.mrb[0].mxu0
    %538 = vdwg.mxu0
    %539 = vmatprep.subr.bf16.mxu0 0
    %540 = vmatpush1.bf16.msra.mxu0 %v387
    %541 = vmatprep.subr.bf16.mxu0 0
    %542 = vmatpush1.bf16.msra.mxu0 %v388
    %543 = vmatprep.subr.bf16.mxu0 0
    %544 = vmatpush1.bf16.msra.mxu0 %v389
    %545 = vmatprep.subr.bf16.mxu0 0
    %546 = vmatpush1.bf16.msra.mxu0 %v390
    %547 = vmatprep.subr.bf16.mxu0 0
    %548 = vmatpush1.bf16.msra.mxu0 %v391
    %549 = vmatprep.subr.bf16.mxu0 0
    %550 = vmatpush1.bf16.msra.mxu0 %v392
    %551 = vmatprep.subr.bf16.mxu0 0
    %552 = vmatpush1.bf16.msra.mxu0 %v393
    %553 = vmatprep.subr.bf16.mxu0 0
    %554 = vmatpush1.bf16.msra.mxu0 %v394
    %555 = vmatprep.subr.bf16.mxu0 0
    %556 = vmatpush1.bf16.msra.mxu0 %v395
    %557 = vmatprep.subr.bf16.mxu0 0
    %558 = vmatpush1.bf16.msra.mxu0 %v396
    %559 = vmatprep.subr.bf16.mxu0 0
    %560 = vmatpush1.bf16.msra.mxu0 %v397
    %561 = vmatprep.subr.bf16.mxu0 0
    %562 = vmatpush1.bf16.msra.mxu0 %v398
    %563 = vmatprep.subr.bf16.mxu0 0
    %564 = vmatpush1.bf16.msra.mxu0 %v399
    %565 = vmatprep.subr.bf16.mxu0 0
    %566 = vmatpush1.bf16.msra.mxu0 %v400
    %567 = vmatprep.subr.bf16.mxu0 0
    %568 = vmatpush1.bf16.msra.mxu0 %v401
    %569 = vmatprep.subr.bf16.mxu0 0
    %570 = vmatpush1.bf16.msra.mxu0 %v402
    %571 = vmatprep.mubr.bf16.mxu0 %v53
    %572 = vmatmul.mubr.bf16.gmra.mrb[0].mxu0 %v52
    %v573 = vpop.f32.mrb[0].mxu0
    %v574 = vadd.f32 %v534, %v573
    %v575 = vpop.f32.mrb[0].mxu0
    %v576 = vpop.f32.mrb[0].mxu0
    %v577 = vpop.f32.mrb[0].mxu0
    %578 = vdwg.mxu0
    %579 = vmatprep.subr.bf16.mxu0 0
    %580 = vmatpush1.bf16.msra.mxu0 %v403
    %581 = vmatprep.subr.bf16.mxu0 0
    %582 = vmatpush1.bf16.msra.mxu0 %v404
    %583 = vmatprep.subr.bf16.mxu0 0
    %584 = vmatpush1.bf16.msra.mxu0 0
    %585 = vmatprep.subr.bf16.mxu0 0
    %586 = vmatpush1.bf16.msra.mxu0 0
    %587 = vmatprep.subr.bf16.mxu0 0
    %588 = vmatpush1.bf16.msra.mxu0 0
    %589 = vmatprep.subr.bf16.mxu0 0
    %590 = vmatpush1.bf16.msra.mxu0 0
    %591 = vmatprep.subr.bf16.mxu0 0
    %592 = vmatpush1.bf16.msra.mxu0 0
    %593 = vmatprep.subr.bf16.mxu0 0
    %594 = vmatpush1.bf16.msra.mxu0 0
    %595 = vmatprep.subr.bf16.mxu0 0
    %596 = vmatpush1.bf16.msra.mxu0 0
    %597 = vmatprep.subr.bf16.mxu0 0
    %598 = vmatpush1.bf16.msra.mxu0 0
    %599 = vmatprep.subr.bf16.mxu0 0
    %600 = vmatpush1.bf16.msra.mxu0 0
    %601 = vmatprep.subr.bf16.mxu0 0
    %602 = vmatpush1.bf16.msra.mxu0 0
    %603 = vmatprep.subr.bf16.mxu0 0
    %604 = vmatpush1.bf16.msra.mxu0 0
    %605 = vmatprep.subr.bf16.mxu0 0
    %606 = vmatpush1.bf16.msra.mxu0 0
    %607 = vmatprep.subr.bf16.mxu0 0
    %608 = vmatpush1.bf16.msra.mxu0 0
    %609 = vmatprep.subr.bf16.mxu0 0
    %610 = vmatpush1.bf16.msra.mxu0 0
    %611 = vmatprep.mubr.bf16.mxu0 0
    %612 = vmatmul.mubr.bf16.gmra.mrb[0].mxu0 %v457
    %v613 = vpop.f32.mrb[0].mxu0
    %v614 = vadd.f32 %v574, %v613
    %v615 = vpop.f32.mrb[0].mxu0
    %v616 = vpop.f32.mrb[0].mxu0
    %v617 = vpop.f32.mrb[0].mxu0
    %618 = vdwg.mxu0
    %v619 = vld [vmem:[%s2] sm:$0xf]
    %v620 = vrot.slane %v614, 4
    %v621 = vadd.f32 %v614, %v620
    %v622 = vrot.slane %v621, 2
    %v623 = vadd.f32 %v621, %v622
    %v624 = vrot.slane %v623, 1
    %v625 = vadd.f32 %v623, %v624
    %v626 = vmul.f32 %v614, %v614
    %v627 = vrot.slane %v626, 4
    %v628 = vadd.f32 %v626, %v627
    %v629 = vrot.slane %v628, 2
    %v630 = vadd.f32 %v628, %v629
    %v631 = vrot.slane %v630, 1
    %v632 = vadd.f32 %v630, %v631
    %v633 = vmul.f32 %v625, 0.125
    %v634 = vmul.f32 %v632, 0.125
    %v635 = vmul.f32 %v633, %v633
    %v636 = vsub.f32 %v634, %v635
    %v637 = vmax.f32 %v636, 0.0
    %v638 = vadd.f32 %v637, 1e-05
    %v639 = vrsqrt.pop %v638
    %v640 = vmul.f32 %v619, %v639
    %v641 = vmul.f32 %v633, %v640
    %v643 = vrot.slane %v641, 7
    %v645 = vsub.f32 %v619, %v643
    %v646 = vlaneseq
    %v647 = vshrl.u32 %v646, 7
    %v648 = vsub.s32 0, %v647
    %v649 = vrot.slane %v640, %v648
    %v650 = vmul.f32 %v614, %v649
    %v651 = vlaneseq
    %v652 = vshrl.u32 %v651, 7
    %v653 = vsub.s32 1, %v652
    %v654 = vrot.slane %v645, %v653
    %v655 = vadd.f32 %v650, %v654
    %v656 = vmax.f32 %v655, 0.0
    %v657 = vlaneseq
    %v658 = vshrl.u32 %v657, 7
    %v659 = vsub.s32 2, %v658
    %v660 = vrot.slane %v619, %v659
    %v661 = vmul.f32 %v656, %v660
    %662 = vadd.xlane.f32.xlu0 %v661
    %v663 = vpop.xlane.xlu0 %662
    %v664 = vlaneseq
    %v665 = vshrl.u32 %v664, 7
    %v666 = vsub.s32 3, %v665
    %v667 = vrot.slane %v619, %v666
    %v668 = vadd.f32 %v663, %v667
    %v669 = vsub.f32 %v668, %v668
    %v670 = vmul.f32 %v669, 1.442695
    %v671 = vpow.pop %v670
    %v672 = vadd.f32 %v671, 0.0
    %v673 = vlog2.pop %v672
    %v674 = vmul.f32 %v673, 0.6931472
    %v675 = vadd.f32 %v668, %v674
    %v676 = vsub.f32 %v668, %v675
    %vm677 = vcmask 7168
    %678 = vst.msk [vmem:[%s3] sm:$0xff] %vm677, %v676
    // Predicated region
    $region22: #{tpu_custom_call.1} parent=1 // pred_check
      _
    $region23: #{tpu_custom_call.1} parent=1 // pred_check_branch
      %680 = sbr.rel (0) target = $region25
    $region24: #{tpu_custom_call.1} parent=1 // pred_region
      _
    $region25: #{tpu_custom_call.1} parent=1 // pred_fallthru
      _
    // Predicated region
    $region26: #{tpu_custom_call.1} parent=1 // pred_check
      _
    $region27: #{tpu_custom_call.1} parent=1 // pred_check_branch
      %682 = sbr.rel (0) target = $region29
    $region28: #{tpu_custom_call.1} parent=1 // pred_region
      _
    $region29: #{tpu_custom_call.1} parent=1 // pred_fallthru
      _
    %683 = vsyncpa [#allocation3], 1
    %684 = vsyncpa [#allocation5], 1

</llo_original>
